<compile_context>
chip_gen: v6e
topology: v6e:2x2x1
jax: 0.10.0
libtpu: 0.0.40
codegen_flags: <defaults>
</compile_context>

<pallas_src>
import functools

import numpy as np

import jax
import jax.numpy as jnp
from jax.experimental import pallas as pl
from jax.experimental.pallas import tpu as pltpu


_MIB = 1024 * 1024


def _round_up(a, b):
    return (a + b - 1) // b * b


def _cdiv(a, b):
    return (a + b - 1) // b


def _vmem_capacity_bytes():
    try:
        return int(pltpu.get_tpu_info().vmem_capacity_bytes)
    except Exception:
        return 64 * _MIB  # v7x per-core capacity — the conservative choice.


def _default_mxu_tile():
    # MXU native tile: 128x128 through v5, 256x256 on v6e / v7x.  Only used
    # by the trace-time association cost model, so a wrong guess is benign.
    try:
        kind = jax.devices()[0].device_kind.lower()
    except Exception:
        return 256
    for tag in ("v2", "v3", "v4", "v5"):
        if tag in kind:
            return 128
    return 256


# --------------------------------------------------------------------------
# Kernel bodies
# --------------------------------------------------------------------------

def _gcn_kernel_adj_first(x_ref, adj_ref, w_ref, o_ref, *, compute_dtype):
    # (adj_tile @ x) @ w  -- cheaper when Fin_p <= Fout_p.
    a = adj_ref[...].astype(compute_dtype)              # per-tile cast (VPU)
    t = jnp.dot(a, x_ref[...], preferred_element_type=jnp.float32)
    out = jnp.dot(t.astype(compute_dtype), w_ref[...],
                  preferred_element_type=jnp.float32)
    o_ref[...] = out.astype(o_ref.dtype)


def _gcn_kernel_xw_first(x_ref, adj_ref, w_ref, o_ref, support_ref, *,
                         compute_dtype):
    # adj_tile @ (x @ w)  -- cheaper when Fout_p < Fin_p.
    # support = x @ w is computed once (first row tile) and cached in VMEM.
    @pl.when(pl.program_id(0) == 0)
    def _():
        s = jnp.dot(x_ref[...], w_ref[...], preferred_element_type=jnp.float32)
        support_ref[...] = s.astype(support_ref.dtype)

    a = adj_ref[...].astype(compute_dtype)
    out = jnp.dot(a, support_ref[...], preferred_element_type=jnp.float32)
    o_ref[...] = out.astype(o_ref.dtype)


def _gcn_kernel_adj_first_ktiled(x_ref, adj_ref, w_ref, o_ref, acc_ref, *,
                                 compute_dtype, tile_k, n_cols, mask_k):
    # K-tiled (adj column) variant with an f32 VMEM accumulator; decouples
    # VMEM from N.  Grid = (row_tiles, k_tiles), k innermost / "arbitrary".
    k = pl.program_id(1)

    @pl.when(k == 0)
    def _():
        acc_ref[...] = jnp.zeros_like(acc_ref)

    a = adj_ref[...].astype(compute_dtype)
    if mask_k:  # trace-time flag: only emitted when N % tile_k != 0
        col = k * tile_k + jax.lax.broadcasted_iota(jnp.int32, a.shape, 1)
        a = jnp.where(col < n_cols, a, jnp.zeros_like(a))
    acc_ref[...] += jnp.dot(a, x_ref[...], preferred_element_type=jnp.float32)

    @pl.when(k == pl.num_programs(1) - 1)
    def _():
        out = jnp.dot(acc_ref[...].astype(compute_dtype), w_ref[...],
                      preferred_element_type=jnp.float32)
        o_ref[...] = out.astype(o_ref.dtype)


# --------------------------------------------------------------------------
# VMEM working-set estimates (for vmem_limit_bytes and tile selection)
# --------------------------------------------------------------------------

def _vmem_bytes_fullwidth(tile, n, fin_p, fout_p, adj_b, cd_b, out_b, xw_first):
    est = 2 * tile * n * adj_b           # adj row blocks (double-buffered)
    est += tile * n * cd_b               # in-kernel cast of the adj tile
    est += n * fin_p * cd_b              # x (resident, single-buffered)
    est += fin_p * fout_p * cd_b         # weight (resident, single-buffered)
    est += 2 * tile * fout_p * out_b     # output blocks (double-buffered)
    est += tile * fout_p * 4             # f32 result of the second matmul
    if xw_first:
        est += n * fout_p * (cd_b + 4)   # support scratch + its f32 precursor
    else:
        est += tile * fin_p * (4 + cd_b)  # f32 t + its low-precision re-cast
    return est


def _vmem_bytes_ktiled(tile_m, tile_k, fin_p, fout_p, adj_b, cd_b, out_b):
    est = 2 * tile_m * tile_k * adj_b    # adj blocks (double-buffered)
    est += tile_m * tile_k * cd_b        # in-kernel cast
    est += 2 * tile_k * fin_p * cd_b     # x row blocks (vary with k)
    est += fin_p * fout_p * cd_b         # weight (resident, single-buffered)
    est += tile_m * fin_p * (4 + cd_b)   # f32 accumulator + its re-cast
    est += 2 * tile_m * fout_p * out_b   # output blocks
    est += tile_m * fout_p * 4           # f32 result of the second matmul
    return est


# --------------------------------------------------------------------------
# Wrapper
# --------------------------------------------------------------------------

def graph_convolution(x, adj, weight, *, tile_m=512, tile_k=512,
                      compute_dtype=jnp.bfloat16, association=None,
                      force_k_tiling=False, core_parallel=False,
                      mxu_tile=None, vmem_limit_bytes=None):
    """ML-GCN GraphConvolution forward: adj @ (x @ weight).

    x: (N, Fin), adj: (N, N), weight: (Fin, Fout) -> (N, Fout) in x.dtype.
    """
    n, fin = x.shape
    fout = weight.shape[1]
    assert adj.shape == (n, n)
    assert weight.shape[0] == fin
    out_dtype = x.dtype

    adj_b = adj.dtype.itemsize
    cd_b = np.dtype(compute_dtype).itemsize
    out_b = np.dtype(out_dtype).itemsize

    # x / weight are tiny relative to adj: cast + zero-pad them once in the
    # wrapper (Fin -> multiple of 128 for an aligned contraction, Fout ->
    # multiple of 128 for lane-dense unmasked stores).  adj is left untouched.
    fin_p = _round_up(fin, 128)
    fout_p = _round_up(fout, 128)
    xc = x.astype(compute_dtype)
    wc = weight.astype(compute_dtype)
    if fin_p != fin:
        xc = jnp.pad(xc, ((0, 0), (0, fin_p - fin)))
        wc = jnp.pad(wc, ((0, fin_p - fin), (0, 0)))
    if fout_p != fout:
        wc = jnp.pad(wc, ((0, 0), (0, fout_p - fout)))

    # Trace-time association choice, rounded to MXU-native tiles so skinny
    # ML-GCN dims (N ~ 20-80, Fin ~ 300) don't mis-estimate MXU cycles.
    mxu = int(mxu_tile) if mxu_tile else _default_mxu_tile()

    def mm_cost(m, k, nn):
        return _round_up(m, 8) * _round_up(k, mxu) * _round_up(nn, mxu)

    cost_adj_first = mm_cost(n, n, fin_p) + mm_cost(n, fin_p, fout_p)
    cost_xw_first = mm_cost(n, fin_p, fout_p) + mm_cost(n, n, fout_p)
    if association is None:
        association = ("adj_first" if cost_adj_first <= cost_xw_first
                       else "xw_first")
    assert association in ("adj_first", "xw_first")
    xw_first = association == "xw_first"

    vmem_cap = min(int(0.9 * _vmem_capacity_bytes()), 100 * _MIB)

    # Row tile: as large as the VMEM budget allows (~0.35us fixed cost/step).
    tile = max(8, min(_round_up(tile_m, 8), _round_up(n, 8)))
    if core_parallel:  # v7x: make sure both TensorCores get row tiles.
        tile = min(tile, max(8, _round_up(_cdiv(n, 2), 8)))

    def full_est(t):
        return _vmem_bytes_fullwidth(t, n, fin_p, fout_p, adj_b, cd_b, out_b,
                                     xw_first)

    while full_est(tile) > vmem_cap and tile > 64:
        tile = max(64, _round_up(tile // 2, 8))

    use_k_tiling = force_k_tiling or full_est(tile) > vmem_cap
    if use_k_tiling:
        # The K-tiled path is adj-first only (a resident (N, Fout) support
        # would defeat the point of K-tiling for large N).
        xw_first = False

    flops = (2 * (n * fin_p * fout_p + n * n * fout_p) if xw_first
             else 2 * (n * n * fin_p + n * fin_p * fout_p))
    bytes_accessed = (n * n * adj_b + n * fin_p * cd_b
                      + fin_p * fout_p * cd_b + n * fout_p * out_b)
    cost_est = pl.CostEstimate(flops=int(flops), transcendentals=0,
                               bytes_accessed=int(bytes_accessed))

    row_sem = pltpu.CORE_PARALLEL if core_parallel else "parallel"

    def run(single_buffer_residents):
        resident_kw = ({"pipeline_mode": pl.Buffered(1)}
                       if single_buffer_residents else {})

        if not use_k_tiling:
            # The xw_first path carries the cached support across row tiles,
            # so its grid axis must stay sequential ("arbitrary"); a
            # core-sharded axis would never run program_id == 0 on core 1.
            sem = ("arbitrary",) if xw_first else (row_sem,)
            kernel = functools.partial(
                _gcn_kernel_xw_first if xw_first else _gcn_kernel_adj_first,
                compute_dtype=compute_dtype)
            scratch = ([pltpu.VMEM((n, fout_p), compute_dtype)]
                       if xw_first else [])
            limit = vmem_limit_bytes or min(
                vmem_cap, max(16 * _MIB, int(1.3 * full_est(tile))))
            return pl.pallas_call(
                kernel,
                out_shape=jax.ShapeDtypeStruct((n, fout_p), out_dtype),
                grid=(_cdiv(n, tile),),
                in_specs=[
                    pl.BlockSpec((n, fin_p), lambda i: (0, 0), **resident_kw),
                    pl.BlockSpec((tile, n), lambda i: (i, 0)),
                    pl.BlockSpec((fin_p, fout_p), lambda i: (0, 0),
                                 **resident_kw),
                ],
                out_specs=pl.BlockSpec((tile, fout_p), lambda i: (i, 0)),
                scratch_shapes=scratch,
                cost_estimate=cost_est,
                compiler_params=pltpu.CompilerParams(
                    dimension_semantics=sem,
                    vmem_limit_bytes=int(limit)),
            )(xc, adj, wc)

        # ----- K-tiled accumulator path (adj columns as a grid axis) -------
        tk = max(128, min(_round_up(tile_k, 128), _round_up(n, 128)))
        tm = max(8, min(_round_up(tile_m, 8), _round_up(n, 8)))
        if core_parallel:
            tm = min(tm, max(8, _round_up(_cdiv(n, 2), 8)))
        while (_vmem_bytes_ktiled(tm, tk, fin_p, fout_p, adj_b, cd_b, out_b)
               > vmem_cap) and (tk > 128 or tm > 64):
            if tk > 128:
                tk = max(128, _round_up(tk // 2, 128))
            else:
                tm = max(64, _round_up(tm // 2, 8))

        n_k = _round_up(n, tk)
        x_k = xc if n_k == n else jnp.pad(xc, ((0, n_k - n), (0, 0)))
        kernel = functools.partial(
            _gcn_kernel_adj_first_ktiled, compute_dtype=compute_dtype,
            tile_k=tk, n_cols=n, mask_k=(n % tk != 0))
        limit = vmem_limit_bytes or min(
            vmem_cap,
            max(16 * _MIB, int(1.3 * _vmem_bytes_ktiled(
                tm, tk, fin_p, fout_p, adj_b, cd_b, out_b))))
        return pl.pallas_call(
            kernel,
            out_shape=jax.ShapeDtypeStruct((n, fout_p), out_dtype),
            grid=(_cdiv(n, tm), n_k // tk),
            in_specs=[
                pl.BlockSpec((tk, fin_p), lambda i, k: (k, 0)),
                pl.BlockSpec((tm, tk), lambda i, k: (i, k)),
                pl.BlockSpec((fin_p, fout_p), lambda i, k: (0, 0),
                             **resident_kw),
            ],
            out_specs=pl.BlockSpec((tm, fout_p), lambda i, k: (i, 0)),
            scratch_shapes=[pltpu.VMEM((tm, fin_p), jnp.float32)],
            cost_estimate=cost_est,
            compiler_params=pltpu.CompilerParams(
                dimension_semantics=(row_sem, "arbitrary"),
                vmem_limit_bytes=int(limit)),
        )(x_k, adj, wc)

    try:
        out = run(single_buffer_residents=True)
    except Exception:
        # Installed jax may not support BlockSpec(pipeline_mode=...) on TPU.
        out = run(single_buffer_residents=False)

    return out if fout_p == fout else out[:, :fout]


# --------------------------------------------------------------------------
# Self-test
# --------------------------------------------------------------------------

if __name__ == "__main__":
    key = jax.random.PRNGKey(0)
    keys = jax.random.split(key, 9)

    def xavier_uniform(k, fan_in, fan_out):
        limit = float(np.sqrt(6.0 / (fan_in + fan_out)))
        return jax.random.uniform(k, (fan_in, fan_out), jnp.float32,
                                  minval=-limit, maxval=limit)

    cd = jnp.bfloat16

    def ref_adj_first(x, adj, w):
        t = jnp.dot(adj.astype(cd), x.astype(cd),
                    preferred_element_type=jnp.float32)
        return jnp.dot(t.astype(cd), w.astype(cd),
                       preferred_element_type=jnp.float32)

    def ref_xw_first(x, adj, w):
        s = jnp.dot(x.astype(cd), w.astype(cd),
                    preferred_element_type=jnp.float32)
        return jnp.dot(adj.astype(cd), s.astype(cd),
                       preferred_element_type=jnp.float32)

    def check(out, ref_matched, ref_f32):
        assert jnp.allclose(out, ref_matched.astype(out.dtype),
                            atol=2e-2, rtol=2e-2)
        rel = (jnp.max(jnp.abs(out - ref_f32))
               / (jnp.max(jnp.abs(ref_f32)) + 1e-6))
        assert rel < 5e-2

    # 1) ML-GCN-like small shape; auto association (-> adj_first).
    n, fi, fo = 16, 32, 64
    x = jax.random.normal(keys[0], (n, fi), jnp.float32)
    adj = jax.random.normal(keys[1], (n, n), jnp.float32)
    w = xavier_uniform(keys[2], fi, fo)
    out = jax.block_until_ready(graph_convolution(x, adj, w))
    assert out.shape == (n, fo) and out.dtype == x.dtype
    check(out, ref_adj_first(x, adj, w), adj @ (x @ w))

    # 2) Cached-support (xw_first) path with multiple row tiles, ragged N.
    n, fi, fo = 20, 256, 32
    x = jax.random.normal(keys[3], (n, fi), jnp.float32)
    adj = jax.random.normal(keys[4], (n, n), jnp.float32)
    w = xavier_uniform(keys[5], fi, fo)
    out = jax.block_until_ready(
        graph_convolution(x, adj, w, association="xw_first", tile_m=8))
    assert out.shape == (n, fo)
    check(out, ref_xw_first(x, adj, w), adj @ (x @ w))

    # 3) K-tiled accumulator path (v7x-style), ragged row tiles and ragged K.
    n, fi, fo = 200, 48, 96
    x = jax.random.normal(keys[6], (n, fi), jnp.float32)
    adj = jax.random.normal(keys[7], (n, n), jnp.float32)
    w = xavier_uniform(keys[8], fi, fo)
    out = jax.block_until_ready(
        graph_convolution(x, adj, w, force_k_tiling=True,
                          tile_m=128, tile_k=128))
    assert out.shape == (n, fo)
    check(out, ref_adj_first(x, adj, w), adj @ (x @ w))

    print("KERNEL_OK")
</pallas_src>

<mosaic_0001>
module attributes {stable_mosaic.version = 11 : i64} {
  func.func @_gcn_kernel_adj_first(%arg0: i32, %arg1: memref<16x128xbf16, #tpu.memory_space<vmem>>, %arg2: memref<16x16xf32, #tpu.memory_space<vmem>>, %arg3: memref<128x128xbf16, #tpu.memory_space<vmem>>, %arg4: memref<16x128xf32, #tpu.memory_space<vmem>>) attributes {dimension_semantics = [#tpu.dimension_semantics<parallel>], iteration_bounds = array<i64: 1>, scalar_prefetch = 0 : i64, scratch_operands = 0 : i64, tpu.core_type = #tpu.core_type<tc>, window_params = [{pipeline_mode = #tpu.pipeline_mode<synchronous>, transform_indices = @transform_0, window_bounds = array<i64: 16, 128>}, {transform_indices = @transform_1, window_bounds = array<i64: 16, 16>}, {pipeline_mode = #tpu.pipeline_mode<synchronous>, transform_indices = @transform_2, window_bounds = array<i64: 128, 128>}, {transform_indices = @transform_3, window_bounds = array<i64: 16, 128>}]} {
    %c0 = arith.constant 0 : index
    %c0_0 = arith.constant 0 : index
    %0 = vector.load %arg2[%c0, %c0_0] : memref<16x16xf32, #tpu.memory_space<vmem>>, vector<16x16xf32>
    %1 = arith.truncf %0 : vector<16x16xf32> to vector<16x16xbf16>
    %c0_1 = arith.constant 0 : index
    %c0_2 = arith.constant 0 : index
    %2 = vector.load %arg1[%c0_1, %c0_2] : memref<16x128xbf16, #tpu.memory_space<vmem>>, vector<16x128xbf16>
    %cst = arith.constant dense<0.000000e+00> : vector<16x128xf32>
    %3 = tpu.matmul %1, %2, %cst {dimension_numbers = #tpu.dot_dimension_numbers<[1], [0], [0], [1], [0, 0, 1, 1], [], []>} : vector<16x16xbf16>, vector<16x128xbf16>, vector<16x128xf32> -> vector<16x128xf32>
    %4 = arith.truncf %3 : vector<16x128xf32> to vector<16x128xbf16>
    %c0_3 = arith.constant 0 : index
    %c0_4 = arith.constant 0 : index
    %5 = vector.load %arg3[%c0_3, %c0_4] : memref<128x128xbf16, #tpu.memory_space<vmem>>, vector<128x128xbf16>
    %cst_5 = arith.constant dense<0.000000e+00> : vector<16x128xf32>
    %6 = tpu.matmul %4, %5, %cst_5 {dimension_numbers = #tpu.dot_dimension_numbers<[1], [0], [0], [1], [0, 0, 1, 1], [], []>} : vector<16x128xbf16>, vector<128x128xbf16>, vector<16x128xf32> -> vector<16x128xf32>
    %c0_6 = arith.constant 0 : index
    %c0_7 = arith.constant 0 : index
    %7 = vector.load %arg4[%c0_6, %c0_7] : memref<16x128xf32, #tpu.memory_space<vmem>>, vector<16x128xf32>
    tpu.vector_store %arg4[%c0_6, %c0_7], %6 {strides = array<i32>} : memref<16x128xf32, #tpu.memory_space<vmem>>, vector<16x128xf32>,
    return
  }
  func.func @transform_0(%arg0: i32) -> (i32, i32) {
    %c0_i32 = arith.constant 0 : i32
    %c0_i32_0 = arith.constant 0 : i32
    %c0_i32_1 = arith.constant 0 : i32
    return %c0_i32, %c0_i32_0 : i32, i32
  }
  func.func @transform_1(%arg0: i32) -> (i32, i32) {
    %c0_i32 = arith.constant 0 : i32
    %c0_i32_0 = arith.constant 0 : i32
    return %arg0, %c0_i32 : i32, i32
  }
  func.func @transform_2(%arg0: i32) -> (i32, i32) {
    %c0_i32 = arith.constant 0 : i32
    %c0_i32_0 = arith.constant 0 : i32
    %c0_i32_1 = arith.constant 0 : i32
    return %c0_i32, %c0_i32_0 : i32, i32
  }
  func.func @transform_3(%arg0: i32) -> (i32, i32) {
    %c0_i32 = arith.constant 0 : i32
    %c0_i32_0 = arith.constant 0 : i32
    return %arg0, %c0_i32 : i32, i32
  }
}

module attributes {stable_mosaic.version = 11 : i64} {
  func.func @_gcn_kernel_adj_first(%arg0: i32, %arg1: memref<16x128xbf16, #tpu.memory_space<vmem>>, %arg2: memref<16x16xf32, #tpu.memory_space<vmem>>, %arg3: memref<128x128xbf16, #tpu.memory_space<vmem>>, %arg4: memref<16x128xf32, #tpu.memory_space<vmem>>) attributes {dimension_semantics = [#tpu.dimension_semantics<parallel>], iteration_bounds = array<i64: 1>, scalar_prefetch = 0 : i64, scratch_operands = 0 : i64, tpu.core_type = #tpu.core_type<tc>, window_params = [{pipeline_mode = #tpu.pipeline_mode<synchronous>, transform_indices = @transform_0, window_bounds = array<i64: 16, 128>}, {transform_indices = @transform_1, window_bounds = array<i64: 16, 16>}, {pipeline_mode = #tpu.pipeline_mode<synchronous>, transform_indices = @transform_2, window_bounds = array<i64: 128, 128>}, {transform_indices = @transform_3, window_bounds = array<i64: 16, 128>}]} {
    %c0 = arith.constant 0 : index
    %c0_0 = arith.constant 0 : index
    %0 = vector.load %arg2[%c0, %c0_0] : memref<16x16xf32, #tpu.memory_space<vmem>>, vector<16x16xf32>
    %1 = arith.truncf %0 : vector<16x16xf32> to vector<16x16xbf16>
    %c0_1 = arith.constant 0 : index
    %c0_2 = arith.constant 0 : index
    %2 = vector.load %arg1[%c0_1, %c0_2] : memref<16x128xbf16, #tpu.memory_space<vmem>>, vector<16x128xbf16>
    %cst = arith.constant dense<0.000000e+00> : vector<16x128xf32>
    %3 = tpu.matmul %1, %2, %cst {dimension_numbers = #tpu.dot_dimension_numbers<[1], [0], [0], [1], [0, 0, 1, 1], [], []>} : vector<16x16xbf16>, vector<16x128xbf16>, vector<16x128xf32> -> vector<16x128xf32>
    %4 = arith.truncf %3 : vector<16x128xf32> to vector<16x128xbf16>
    %c0_3 = arith.constant 0 : index
    %c0_4 = arith.constant 0 : index
    %5 = vector.load %arg3[%c0_3, %c0_4] : memref<128x128xbf16, #tpu.memory_space<vmem>>, vector<128x128xbf16>
    %cst_5 = arith.constant dense<0.000000e+00> : vector<16x128xf32>
    %6 = tpu.matmul %4, %5, %cst_5 {dimension_numbers = #tpu.dot_dimension_numbers<[1], [0], [0], [1], [0, 0, 1, 1], [], []>} : vector<16x128xbf16>, vector<128x128xbf16>, vector<16x128xf32> -> vector<16x128xf32>
    %c0_6 = arith.constant 0 : index
    %c0_7 = arith.constant 0 : index
    %7 = vector.load %arg4[%c0_6, %c0_7] : memref<16x128xf32, #tpu.memory_space<vmem>>, vector<16x128xf32>
    tpu.vector_store %arg4[%c0_6, %c0_7], %6 {strides = array<i32>} : memref<16x128xf32, #tpu.memory_space<vmem>>, vector<16x128xf32>,
    return
  }
  func.func @transform_0(%arg0: i32) -> (i32, i32) {
    %c0_i32 = arith.constant 0 : i32
    %c0_i32_0 = arith.constant 0 : i32
    %c0_i32_1 = arith.constant 0 : i32
    return %c0_i32, %c0_i32_0 : i32, i32
  }
  func.func @transform_1(%arg0: i32) -> (i32, i32) {
    %c0_i32 = arith.constant 0 : i32
    %c0_i32_0 = arith.constant 0 : i32
    return %arg0, %c0_i32 : i32, i32
  }
  func.func @transform_2(%arg0: i32) -> (i32, i32) {
    %c0_i32 = arith.constant 0 : i32
    %c0_i32_0 = arith.constant 0 : i32
    %c0_i32_1 = arith.constant 0 : i32
    return %c0_i32, %c0_i32_0 : i32, i32
  }
  func.func @transform_3(%arg0: i32) -> (i32, i32) {
    %c0_i32 = arith.constant 0 : i32
    %c0_i32_0 = arith.constant 0 : i32
    return %arg0, %c0_i32 : i32, i32
  }
}

</mosaic_0001>

<llo_original>
// kernel: tpu_custom_call.1
$region0: #{tpu_custom_call.1}
  #allocation0 [shape = 'u32[]', space=smem, size = 0x4, offset = 0x4, fixed_abs, tag = 'smem constant byte address 0x4 - core index']
  #allocation1 [shape = 'u32[144,128]{1,0:T(1,128)}', space=vmem, size = 0x12000, scoped, tag = 'internal scratch']
  %s0 = inlined_call_operand.hbm [shape: bf16[16,128], index: 0, kind: input, shape index: {}]
  %s1 = inlined_call_operand.hbm [shape: f32[16,16], index: 1, kind: input, shape index: {}]
  %s2 = inlined_call_operand.hbm [shape: bf16[128,128], index: 2, kind: input, shape index: {}]
  %s3 = inlined_call_operand.hbm [shape: f32[16,128], index: 3, kind: output, shape index: {}]
  %s4 = sld [smem:[#allocation0]]
  $region34: #{tpu_custom_call.1} parent=0
    _
  %s6 = ssub.s32 1, %s4
  %s7 = scalar_select 0, %s6, %s4
  $region1: #{tpu_custom_call.1} parent=0
    #allocation2 [shape = 'u8[4096]{0}', space=vmem, size = 0x1000, scoped, tag = 'input window, operand 0, single buffered']
    #allocation3 [shape = 's32[1]{0}', space=sflag, size = 0x4, scoped, tag = 'scoped memory for tpu_custom_call.1']
    #allocation4 [shape = 's32[1]{0}', space=sflag, size = 0x4, scoped, tag = 'scoped memory for tpu_custom_call.1']
    #allocation5 [shape = 'u8[8192]{0}', space=vmem, size = 0x2000, scoped, tag = 'input window, operand 1, single buffered']
    #allocation6 [shape = 's32[1]{0}', space=sflag, size = 0x4, scoped, tag = 'scoped memory for tpu_custom_call.1']
    #allocation7 [shape = 'u8[32768]{0}', space=vmem, size = 0x8000, scoped, tag = 'input window, operand 2, single buffered']
    #allocation8 [shape = 'u8[8192]{0}', space=vmem, size = 0x2000, scoped, tag = 'output window, operand 0, single buffered']
    %8 = vsyncpa [#allocation3], 0
    %9 = vsyncpa [#allocation6], 0
    %10 = vsyncpa [#allocation4], 0
    // Predicated region
    $region2: #{tpu_custom_call.1} parent=1 // pred_check
      _
    $region3: #{tpu_custom_call.1} parent=1 // pred_check_branch
      %12 = sbr.rel (0) target = $region5
    $region4: #{tpu_custom_call.1} parent=1 // pred_region
      %s14 = ssub.s32 128, 128
      %15 = vsyncadd [#allocation3], %s14
      %s16 = sshll.u32 [#allocation2], 4
      %s17 = int_to_ptr.vmem [resolvable:$true] %s16
      %22 = dma.hbm_to_vmem [thread:$0]  %s0, 128, %s17, [#allocation3], 64, 64, 4
    $region5: #{tpu_custom_call.1} parent=1 // pred_fallthru
      _
    // Predicated region
    $region6: #{tpu_custom_call.1} parent=1 // pred_check
      _
    $region7: #{tpu_custom_call.1} parent=1 // pred_check_branch
      %24 = sbr.rel (0) target = $region9
    $region8: #{tpu_custom_call.1} parent=1 // pred_region
      %s26 = ssub.s32 256, 256
      %27 = vsyncadd [#allocation6], %s26
      %s28 = sshll.u32 [#allocation5], 4
      %s29 = int_to_ptr.vmem [resolvable:$true] %s28
      %34 = dma.hbm_to_vmem [thread:$0]  %s1, 256, %s29, [#allocation6], 128, 128, 8
    $region9: #{tpu_custom_call.1} parent=1 // pred_fallthru
      _
    // Predicated region
    $region10: #{tpu_custom_call.1} parent=1 // pred_check
      _
    $region11: #{tpu_custom_call.1} parent=1 // pred_check_branch
      %36 = sbr.rel (0) target = $region13
    $region12: #{tpu_custom_call.1} parent=1 // pred_region
      %s38 = ssub.s32 1024, 1024
      %39 = vsyncadd [#allocation6], %s38
      %s40 = sshll.u32 [#allocation7], 4
      %s41 = int_to_ptr.vmem [resolvable:$true] %s40
      %46 = dma.hbm_to_vmem [thread:$0]  %s2, 1024, %s41, [#allocation6], 64, 64, 4
    $region13: #{tpu_custom_call.1} parent=1 // pred_fallthru
      _
    // Predicated region
    $region14: #{tpu_custom_call.1} parent=1 // pred_check
      _
    $region15: #{tpu_custom_call.1} parent=1 // pred_check_branch
      %48 = sbr.rel (0) target = $region17
    $region16: #{tpu_custom_call.1} parent=1 // pred_region
      %49 = dma.done [#allocation3], 128
    $region17: #{tpu_custom_call.1} parent=1 // pred_fallthru
      _
    // Predicated region
    $region18: #{tpu_custom_call.1} parent=1 // pred_check
      _
    $region19: #{tpu_custom_call.1} parent=1 // pred_check_branch
      %51 = sbr.rel (0) target = $region21
    $region20: #{tpu_custom_call.1} parent=1 // pred_region
      %52 = dma.done [#allocation6], 256
    $region21: #{tpu_custom_call.1} parent=1 // pred_fallthru
      _
    // Predicated region
    $region22: #{tpu_custom_call.1} parent=1 // pred_check
      _
    $region23: #{tpu_custom_call.1} parent=1 // pred_check_branch
      %54 = sbr.rel (0) target = $region25
    $region24: #{tpu_custom_call.1} parent=1 // pred_region
      %55 = dma.done [#allocation6], 1024
    $region25: #{tpu_custom_call.1} parent=1 // pred_fallthru
      _
    %v57 = vld [vmem:[#allocation5] sm:$0xff]
    %v58 = vld [vmem:[#allocation5 + $0x8] sm:$0xff]
    %v59 = vpack.c.bf16 %v58, %v57
    %v60 = vld [vmem:[#allocation2] sm:$0xf]
    %v61 = vld [vmem:[#allocation2 + $0x4] sm:$0xf]
    %v64 = vunpack.c.l.b16 %v60
    %v65 = vunpack.c.l.b16 %v61
    %v66 = vpack.c.b16 %v65, %v64
    %vm68 = vcmask 130048
    %v70 = vsel %vm68, %v59, 0
    %72 = vmatprep.subr.bf16.mxu0 0
    %73 = vmatpush1.bf16.msra.mxu0 0
    %74 = vmatprep.subr.bf16.mxu0 0
    %75 = vmatpush1.bf16.msra.mxu0 0
    %76 = vmatprep.subr.bf16.mxu0 0
    %77 = vmatpush1.bf16.msra.mxu0 0
    %78 = vmatprep.subr.bf16.mxu0 0
    %79 = vmatpush1.bf16.msra.mxu0 0
    %80 = vmatprep.subr.bf16.mxu0 0
    %81 = vmatpush1.bf16.msra.mxu0 0
    %82 = vmatprep.subr.bf16.mxu0 0
    %83 = vmatpush1.bf16.msra.mxu0 0
    %84 = vmatprep.subr.bf16.mxu0 0
    %85 = vmatpush1.bf16.msra.mxu0 0
    %86 = vmatprep.subr.bf16.mxu0 0
    %87 = vmatpush1.bf16.msra.mxu0 %v66
    %88 = vmatprep.subr.bf16.mxu0 0
    %89 = vmatpush2.bf16.msra.mxu0 0
    %90 = vmatprep.subr.bf16.mxu0 0
    %91 = vmatpush2.bf16.msra.mxu0 0
    %92 = vmatprep.subr.bf16.mxu0 0
    %93 = vmatpush2.bf16.msra.mxu0 0
    %94 = vmatprep.subr.bf16.mxu0 0
    %95 = vmatpush2.bf16.msra.mxu0 0
    %96 = vmatprep.subr.bf16.mxu0 0
    %97 = vmatpush2.bf16.msra.mxu0 0
    %98 = vmatprep.subr.bf16.mxu0 0
    %99 = vmatpush2.bf16.msra.mxu0 0
    %100 = vmatprep.subr.bf16.mxu0 0
    %101 = vmatpush2.bf16.msra.mxu0 0
    %102 = vmatprep.subr.bf16.mxu0 0
    %103 = vmatpush2.bf16.msra.mxu0 0
    %104 = vmatprep.mubr.bf16.mxu0 0
    %105 = vmatmul.mubr.bf16.gmra.mxu0 %v70
    %v106 = vpop.f32.mrf.mxu0
    %v107 = vadd.f32 0.0, %v106
    %v108 = vpop.f32.mrf.mxu0
    %v109 = vpop.f32.mrf.mxu0
    %v110 = vadd.f32 0.0, %v109
    %v111 = vpop.f32.mrf.mxu0
    %112 = vdwg.mxu0
    %v113 = vpack.c.bf16 %v110, %v107
    %v114 = vld [vmem:[#allocation7] sm:$0xf]
    %v115 = vld [vmem:[#allocation7 + $0x4] sm:$0xf]
    %v116 = vld [vmem:[#allocation7 + $0x8] sm:$0xf]
    %v117 = vld [vmem:[#allocation7 + $0xc] sm:$0xf]
    %v118 = vld [vmem:[#allocation7 + $0x10] sm:$0xf]
    %v119 = vld [vmem:[#allocation7 + $0x14] sm:$0xf]
    %v120 = vld [vmem:[#allocation7 + $0x18] sm:$0xf]
    %v121 = vld [vmem:[#allocation7 + $0x1c] sm:$0xf]
    %v122 = vld [vmem:[#allocation7 + $0x20] sm:$0xf]
    %v123 = vld [vmem:[#allocation7 + $0x24] sm:$0xf]
    %v124 = vld [vmem:[#allocation7 + $0x28] sm:$0xf]
    %v125 = vld [vmem:[#allocation7 + $0x2c] sm:$0xf]
    %v126 = vld [vmem:[#allocation7 + $0x30] sm:$0xf]
    %v127 = vld [vmem:[#allocation7 + $0x34] sm:$0xf]
    %v128 = vld [vmem:[#allocation7 + $0x38] sm:$0xf]
    %v129 = vld [vmem:[#allocation7 + $0x3c] sm:$0xf]
    %v146 = vunpack.c.l.b16 %v114
    %v147 = vunpack.c.l.b16 %v115
    %v148 = vunpack.c.l.b16 %v116
    %v149 = vunpack.c.l.b16 %v117
    %v150 = vunpack.c.l.b16 %v118
    %v151 = vunpack.c.l.b16 %v119
    %v152 = vunpack.c.l.b16 %v120
    %v153 = vunpack.c.l.b16 %v121
    %v154 = vunpack.c.l.b16 %v122
    %v155 = vunpack.c.l.b16 %v123
    %v156 = vunpack.c.l.b16 %v124
    %v157 = vunpack.c.l.b16 %v125
    %v158 = vunpack.c.l.b16 %v126
    %v159 = vunpack.c.l.b16 %v127
    %v160 = vunpack.c.l.b16 %v128
    %v161 = vunpack.c.l.b16 %v129
    %v162 = vpack.c.b16 %v147, %v146
    %v163 = vpack.c.b16 %v149, %v148
    %v164 = vpack.c.b16 %v151, %v150
    %v165 = vpack.c.b16 %v153, %v152
    %v166 = vpack.c.b16 %v155, %v154
    %v167 = vpack.c.b16 %v157, %v156
    %v168 = vpack.c.b16 %v159, %v158
    %v169 = vpack.c.b16 %v161, %v160
    %178 = vmatprep.subr.bf16.mxu0 0
    %179 = vmatpush1.bf16.msra.mxu0 %v169
    %180 = vmatprep.subr.bf16.mxu0 0
    %181 = vmatpush1.bf16.msra.mxu0 %v168
    %182 = vmatprep.subr.bf16.mxu0 0
    %183 = vmatpush1.bf16.msra.mxu0 %v167
    %184 = vmatprep.subr.bf16.mxu0 0
    %185 = vmatpush1.bf16.msra.mxu0 %v166
    %186 = vmatprep.subr.bf16.mxu0 0
    %187 = vmatpush1.bf16.msra.mxu0 %v165
    %188 = vmatprep.subr.bf16.mxu0 0
    %189 = vmatpush1.bf16.msra.mxu0 %v164
    %190 = vmatprep.subr.bf16.mxu0 0
    %191 = vmatpush1.bf16.msra.mxu0 %v163
    %192 = vmatprep.subr.bf16.mxu0 0
    %193 = vmatpush1.bf16.msra.mxu0 %v162
    %194 = vmatprep.subr.bf16.mxu0 0
    %195 = vmatpush2.bf16.msra.mxu0 0
    %196 = vmatprep.subr.bf16.mxu0 0
    %197 = vmatpush2.bf16.msra.mxu0 0
    %198 = vmatprep.subr.bf16.mxu0 0
    %199 = vmatpush2.bf16.msra.mxu0 0
    %200 = vmatprep.subr.bf16.mxu0 0
    %201 = vmatpush2.bf16.msra.mxu0 0
    %202 = vmatprep.subr.bf16.mxu0 0
    %203 = vmatpush2.bf16.msra.mxu0 0
    %204 = vmatprep.subr.bf16.mxu0 0
    %205 = vmatpush2.bf16.msra.mxu0 0
    %206 = vmatprep.subr.bf16.mxu0 0
    %207 = vmatpush2.bf16.msra.mxu0 0
    %208 = vmatprep.subr.bf16.mxu0 0
    %209 = vmatpush2.bf16.msra.mxu0 0
    %210 = vmatprep.mubr.bf16.mxu0 0
    %211 = vmatmul.mubr.bf16.gmra.mxu0 %v113
    %v212 = vpop.f32.mrf.mxu0
    %v213 = vadd.f32 0.0, %v212
    %v214 = vpop.f32.mrf.mxu0
    %v215 = vpop.f32.mrf.mxu0
    %v216 = vadd.f32 0.0, %v215
    %v217 = vpop.f32.mrf.mxu0
    %218 = vdwg.mxu0
    %219 = vst [vmem:[#allocation8] sm:$0xff] %v213
    %220 = vst [vmem:[#allocation8 + $0x8] sm:$0xff] %v216
    // Predicated region
    $region26: #{tpu_custom_call.1} parent=1 // pred_check
      _
    $region27: #{tpu_custom_call.1} parent=1 // pred_check_branch
      %222 = sbr.rel (0) target = $region29
    $region28: #{tpu_custom_call.1} parent=1 // pred_region
      %s224 = ssub.s32 256, 256
      %225 = vsyncadd [#allocation4], %s224
      %s226 = sshll.u32 [#allocation8], 4
      %s227 = int_to_ptr.vmem [resolvable:$true] %s226
      %232 = dma.vmem_to_hbm [thread:$0]  %s227, 256, %s3, [#allocation4], 128, 128, 8
    $region29: #{tpu_custom_call.1} parent=1 // pred_fallthru
      _
    // Predicated region
    $region30: #{tpu_custom_call.1} parent=1 // pred_check
      _
    $region31: #{tpu_custom_call.1} parent=1 // pred_check_branch
      %234 = sbr.rel (0) target = $region33
    $region32: #{tpu_custom_call.1} parent=1 // pred_region
      %235 = dma.done [#allocation4], 256
    $region33: #{tpu_custom_call.1} parent=1 // pred_fallthru
      _
    %236 = vsyncpa [#allocation3], 1
    %237 = vsyncpa [#allocation6], 1
    %238 = vsyncpa [#allocation4], 1

// kernel: tpu_custom_call.1
$region0: #{tpu_custom_call.1}
  #allocation0 [shape = 'u32[]', space=smem, size = 0x4, offset = 0x4, fixed_abs, tag = 'smem constant byte address 0x4 - core index']
  #allocation1 [shape = 'u32[144,128]{1,0:T(1,128)}', space=vmem, size = 0x12000, scoped, tag = 'internal scratch']
  %s0 = inlined_call_operand.hbm [shape: bf16[16,128], index: 0, kind: input, shape index: {}]
  %s1 = inlined_call_operand.hbm [shape: f32[16,16], index: 1, kind: input, shape index: {}]
  %s2 = inlined_call_operand.hbm [shape: bf16[128,128], index: 2, kind: input, shape index: {}]
  %s3 = inlined_call_operand.hbm [shape: f32[16,128], index: 3, kind: output, shape index: {}]
  %s4 = sld [smem:[#allocation0]]
  $region34: #{tpu_custom_call.1} parent=0
    _
  %s6 = ssub.s32 1, %s4
  %s7 = scalar_select 0, %s6, %s4
  $region1: #{tpu_custom_call.1} parent=0
    #allocation2 [shape = 'u8[4096]{0}', space=vmem, size = 0x1000, scoped, tag = 'input window, operand 0, single buffered']
    #allocation3 [shape = 's32[1]{0}', space=sflag, size = 0x4, scoped, tag = 'scoped memory for tpu_custom_call.1']
    #allocation4 [shape = 's32[1]{0}', space=sflag, size = 0x4, scoped, tag = 'scoped memory for tpu_custom_call.1']
    #allocation5 [shape = 'u8[8192]{0}', space=vmem, size = 0x2000, scoped, tag = 'input window, operand 1, single buffered']
    #allocation6 [shape = 's32[1]{0}', space=sflag, size = 0x4, scoped, tag = 'scoped memory for tpu_custom_call.1']
    #allocation7 [shape = 'u8[32768]{0}', space=vmem, size = 0x8000, scoped, tag = 'input window, operand 2, single buffered']
    #allocation8 [shape = 'u8[8192]{0}', space=vmem, size = 0x2000, scoped, tag = 'output window, operand 0, single buffered']
    %8 = vsyncpa [#allocation3], 0
    %9 = vsyncpa [#allocation6], 0
    %10 = vsyncpa [#allocation4], 0
    // Predicated region
    $region2: #{tpu_custom_call.1} parent=1 // pred_check
      _
    $region3: #{tpu_custom_call.1} parent=1 // pred_check_branch
      %12 = sbr.rel (0) target = $region5
    $region4: #{tpu_custom_call.1} parent=1 // pred_region
      %s14 = ssub.s32 128, 128
      %15 = vsyncadd [#allocation3], %s14
      %s16 = sshll.u32 [#allocation2], 4
      %s17 = int_to_ptr.vmem [resolvable:$true] %s16
      %22 = dma.hbm_to_vmem [thread:$0]  %s0, 128, %s17, [#allocation3], 64, 64, 4
    $region5: #{tpu_custom_call.1} parent=1 // pred_fallthru
      _
    // Predicated region
    $region6: #{tpu_custom_call.1} parent=1 // pred_check
      _
    $region7: #{tpu_custom_call.1} parent=1 // pred_check_branch
      %24 = sbr.rel (0) target = $region9
    $region8: #{tpu_custom_call.1} parent=1 // pred_region
      %s26 = ssub.s32 256, 256
      %27 = vsyncadd [#allocation6], %s26
      %s28 = sshll.u32 [#allocation5], 4
      %s29 = int_to_ptr.vmem [resolvable:$true] %s28
      %34 = dma.hbm_to_vmem [thread:$0]  %s1, 256, %s29, [#allocation6], 128, 128, 8
    $region9: #{tpu_custom_call.1} parent=1 // pred_fallthru
      _
    // Predicated region
    $region10: #{tpu_custom_call.1} parent=1 // pred_check
      _
    $region11: #{tpu_custom_call.1} parent=1 // pred_check_branch
      %36 = sbr.rel (0) target = $region13
    $region12: #{tpu_custom_call.1} parent=1 // pred_region
      %s38 = ssub.s32 1024, 1024
      %39 = vsyncadd [#allocation6], %s38
      %s40 = sshll.u32 [#allocation7], 4
      %s41 = int_to_ptr.vmem [resolvable:$true] %s40
      %46 = dma.hbm_to_vmem [thread:$0]  %s2, 1024, %s41, [#allocation6], 64, 64, 4
    $region13: #{tpu_custom_call.1} parent=1 // pred_fallthru
      _
    // Predicated region
    $region14: #{tpu_custom_call.1} parent=1 // pred_check
      _
    $region15: #{tpu_custom_call.1} parent=1 // pred_check_branch
      %48 = sbr.rel (0) target = $region17
    $region16: #{tpu_custom_call.1} parent=1 // pred_region
      %49 = dma.done [#allocation3], 128
    $region17: #{tpu_custom_call.1} parent=1 // pred_fallthru
      _
    // Predicated region
    $region18: #{tpu_custom_call.1} parent=1 // pred_check
      _
    $region19: #{tpu_custom_call.1} parent=1 // pred_check_branch
      %51 = sbr.rel (0) target = $region21
    $region20: #{tpu_custom_call.1} parent=1 // pred_region
      %52 = dma.done [#allocation6], 256
    $region21: #{tpu_custom_call.1} parent=1 // pred_fallthru
      _
    // Predicated region
    $region22: #{tpu_custom_call.1} parent=1 // pred_check
      _
    $region23: #{tpu_custom_call.1} parent=1 // pred_check_branch
      %54 = sbr.rel (0) target = $region25
    $region24: #{tpu_custom_call.1} parent=1 // pred_region
      %55 = dma.done [#allocation6], 1024
    $region25: #{tpu_custom_call.1} parent=1 // pred_fallthru
      _
    %v57 = vld [vmem:[#allocation5] sm:$0xff]
    %v58 = vld [vmem:[#allocation5 + $0x8] sm:$0xff]
    %v59 = vpack.c.bf16 %v58, %v57
    %v60 = vld [vmem:[#allocation2] sm:$0xf]
    %v61 = vld [vmem:[#allocation2 + $0x4] sm:$0xf]
    %v64 = vunpack.c.l.b16 %v60
    %v65 = vunpack.c.l.b16 %v61
    %v66 = vpack.c.b16 %v65, %v64
    %vm68 = vcmask 130048
    %v70 = vsel %vm68, %v59, 0
    %72 = vmatprep.subr.bf16.mxu0 0
    %73 = vmatpush1.bf16.msra.mxu0 0
    %74 = vmatprep.subr.bf16.mxu0 0
    %75 = vmatpush1.bf16.msra.mxu0 0
    %76 = vmatprep.subr.bf16.mxu0 0
    %77 = vmatpush1.bf16.msra.mxu0 0
    %78 = vmatprep.subr.bf16.mxu0 0
    %79 = vmatpush1.bf16.msra.mxu0 0
    %80 = vmatprep.subr.bf16.mxu0 0
    %81 = vmatpush1.bf16.msra.mxu0 0
    %82 = vmatprep.subr.bf16.mxu0 0
    %83 = vmatpush1.bf16.msra.mxu0 0
    %84 = vmatprep.subr.bf16.mxu0 0
    %85 = vmatpush1.bf16.msra.mxu0 0
    %86 = vmatprep.subr.bf16.mxu0 0
    %87 = vmatpush1.bf16.msra.mxu0 %v66
    %88 = vmatprep.subr.bf16.mxu0 0
    %89 = vmatpush2.bf16.msra.mxu0 0
    %90 = vmatprep.subr.bf16.mxu0 0
    %91 = vmatpush2.bf16.msra.mxu0 0
    %92 = vmatprep.subr.bf16.mxu0 0
    %93 = vmatpush2.bf16.msra.mxu0 0
    %94 = vmatprep.subr.bf16.mxu0 0
    %95 = vmatpush2.bf16.msra.mxu0 0
    %96 = vmatprep.subr.bf16.mxu0 0
    %97 = vmatpush2.bf16.msra.mxu0 0
    %98 = vmatprep.subr.bf16.mxu0 0
    %99 = vmatpush2.bf16.msra.mxu0 0
    %100 = vmatprep.subr.bf16.mxu0 0
    %101 = vmatpush2.bf16.msra.mxu0 0
    %102 = vmatprep.subr.bf16.mxu0 0
    %103 = vmatpush2.bf16.msra.mxu0 0
    %104 = vmatprep.mubr.bf16.mxu0 0
    %105 = vmatmul.mubr.bf16.gmra.mxu0 %v70
    %v106 = vpop.f32.mrf.mxu0
    %v107 = vadd.f32 0.0, %v106
    %v108 = vpop.f32.mrf.mxu0
    %v109 = vpop.f32.mrf.mxu0
    %v110 = vadd.f32 0.0, %v109
    %v111 = vpop.f32.mrf.mxu0
    %112 = vdwg.mxu0
    %v113 = vpack.c.bf16 %v110, %v107
    %v114 = vld [vmem:[#allocation7] sm:$0xf]
    %v115 = vld [vmem:[#allocation7 + $0x4] sm:$0xf]
    %v116 = vld [vmem:[#allocation7 + $0x8] sm:$0xf]
    %v117 = vld [vmem:[#allocation7 + $0xc] sm:$0xf]
    %v118 = vld [vmem:[#allocation7 + $0x10] sm:$0xf]
    %v119 = vld [vmem:[#allocation7 + $0x14] sm:$0xf]
    %v120 = vld [vmem:[#allocation7 + $0x18] sm:$0xf]
    %v121 = vld [vmem:[#allocation7 + $0x1c] sm:$0xf]
    %v122 = vld [vmem:[#allocation7 + $0x20] sm:$0xf]
    %v123 = vld [vmem:[#allocation7 + $0x24] sm:$0xf]
    %v124 = vld [vmem:[#allocation7 + $0x28] sm:$0xf]
    %v125 = vld [vmem:[#allocation7 + $0x2c] sm:$0xf]
    %v126 = vld [vmem:[#allocation7 + $0x30] sm:$0xf]
    %v127 = vld [vmem:[#allocation7 + $0x34] sm:$0xf]
    %v128 = vld [vmem:[#allocation7 + $0x38] sm:$0xf]
    %v129 = vld [vmem:[#allocation7 + $0x3c] sm:$0xf]
    %v146 = vunpack.c.l.b16 %v114
    %v147 = vunpack.c.l.b16 %v115
    %v148 = vunpack.c.l.b16 %v116
    %v149 = vunpack.c.l.b16 %v117
    %v150 = vunpack.c.l.b16 %v118
    %v151 = vunpack.c.l.b16 %v119
    %v152 = vunpack.c.l.b16 %v120
    %v153 = vunpack.c.l.b16 %v121
    %v154 = vunpack.c.l.b16 %v122
    %v155 = vunpack.c.l.b16 %v123
    %v156 = vunpack.c.l.b16 %v124
    %v157 = vunpack.c.l.b16 %v125
    %v158 = vunpack.c.l.b16 %v126
    %v159 = vunpack.c.l.b16 %v127
    %v160 = vunpack.c.l.b16 %v128
    %v161 = vunpack.c.l.b16 %v129
    %v162 = vpack.c.b16 %v147, %v146
    %v163 = vpack.c.b16 %v149, %v148
    %v164 = vpack.c.b16 %v151, %v150
    %v165 = vpack.c.b16 %v153, %v152
    %v166 = vpack.c.b16 %v155, %v154
    %v167 = vpack.c.b16 %v157, %v156
    %v168 = vpack.c.b16 %v159, %v158
    %v169 = vpack.c.b16 %v161, %v160
    %178 = vmatprep.subr.bf16.mxu0 0
    %179 = vmatpush1.bf16.msra.mxu0 %v169
    %180 = vmatprep.subr.bf16.mxu0 0
    %181 = vmatpush1.bf16.msra.mxu0 %v168
    %182 = vmatprep.subr.bf16.mxu0 0
    %183 = vmatpush1.bf16.msra.mxu0 %v167
    %184 = vmatprep.subr.bf16.mxu0 0
    %185 = vmatpush1.bf16.msra.mxu0 %v166
    %186 = vmatprep.subr.bf16.mxu0 0
    %187 = vmatpush1.bf16.msra.mxu0 %v165
    %188 = vmatprep.subr.bf16.mxu0 0
    %189 = vmatpush1.bf16.msra.mxu0 %v164
    %190 = vmatprep.subr.bf16.mxu0 0
    %191 = vmatpush1.bf16.msra.mxu0 %v163
    %192 = vmatprep.subr.bf16.mxu0 0
    %193 = vmatpush1.bf16.msra.mxu0 %v162
    %194 = vmatprep.subr.bf16.mxu0 0
    %195 = vmatpush2.bf16.msra.mxu0 0
    %196 = vmatprep.subr.bf16.mxu0 0
    %197 = vmatpush2.bf16.msra.mxu0 0
    %198 = vmatprep.subr.bf16.mxu0 0
    %199 = vmatpush2.bf16.msra.mxu0 0
    %200 = vmatprep.subr.bf16.mxu0 0
    %201 = vmatpush2.bf16.msra.mxu0 0
    %202 = vmatprep.subr.bf16.mxu0 0
    %203 = vmatpush2.bf16.msra.mxu0 0
    %204 = vmatprep.subr.bf16.mxu0 0
    %205 = vmatpush2.bf16.msra.mxu0 0
    %206 = vmatprep.subr.bf16.mxu0 0
    %207 = vmatpush2.bf16.msra.mxu0 0
    %208 = vmatprep.subr.bf16.mxu0 0
    %209 = vmatpush2.bf16.msra.mxu0 0
    %210 = vmatprep.mubr.bf16.mxu0 0
    %211 = vmatmul.mubr.bf16.gmra.mxu0 %v113
    %v212 = vpop.f32.mrf.mxu0
    %v213 = vadd.f32 0.0, %v212
    %v214 = vpop.f32.mrf.mxu0
    %v215 = vpop.f32.mrf.mxu0
    %v216 = vadd.f32 0.0, %v215
    %v217 = vpop.f32.mrf.mxu0
    %218 = vdwg.mxu0
    %219 = vst [vmem:[#allocation8] sm:$0xff] %v213
    %220 = vst [vmem:[#allocation8 + $0x8] sm:$0xff] %v216
    // Predicated region
    $region26: #{tpu_custom_call.1} parent=1 // pred_check
      _
    $region27: #{tpu_custom_call.1} parent=1 // pred_check_branch
      %222 = sbr.rel (0) target = $region29
    $region28: #{tpu_custom_call.1} parent=1 // pred_region
      %s224 = ssub.s32 256, 256
      %225 = vsyncadd [#allocation4], %s224
      %s226 = sshll.u32 [#allocation8], 4
      %s227 = int_to_ptr.vmem [resolvable:$true] %s226
      %232 = dma.vmem_to_hbm [thread:$0]  %s227, 256, %s3, [#allocation4], 128, 128, 8
    $region29: #{tpu_custom_call.1} parent=1 // pred_fallthru
      _
    // Predicated region
    $region30: #{tpu_custom_call.1} parent=1 // pred_check
      _
    $region31: #{tpu_custom_call.1} parent=1 // pred_check_branch
      %234 = sbr.rel (0) target = $region33
    $region32: #{tpu_custom_call.1} parent=1 // pred_region
      %235 = dma.done [#allocation4], 256
    $region33: #{tpu_custom_call.1} parent=1 // pred_fallthru
      _
    %236 = vsyncpa [#allocation3], 1
    %237 = vsyncpa [#allocation6], 1
    %238 = vsyncpa [#allocation4], 1

</llo_original>
